<compile_context>
chip_gen: v6e
topology: v6e:2x2x1
jax: 0.10.0
libtpu: 0.0.40
codegen_flags: <defaults>
</compile_context>

<pallas_src>
import functools
import math

import jax
import jax.numpy as jnp
from jax import lax
from jax.experimental import pallas as pl
from jax.experimental.pallas import tpu as pltpu


def _round_up(x: int, m: int) -> int:
    return ((x + m - 1) // m) * m


# ---------------------------------------------------------------------------
# Kernel 1: fused Q/K/V projection.  One MXU matmul X @ [Wq' | Wk' | Wv'],
# bf16 operands, f32 accumulation, tiled over the sequence dimension.
# ---------------------------------------------------------------------------
def _qkv_proj_kernel(x_ref, w_ref, q_ref, k_ref, v_ref, *, dk_p, dv_p):
    x = x_ref[...].astype(jnp.bfloat16)                   # (blk, dm_p) bf16
    qkv = jnp.dot(x, w_ref[...],
                  preferred_element_type=jnp.float32)     # (blk, 2*dk_p+dv_p)
    q_ref[...] = qkv[:, :dk_p].astype(q_ref.dtype)
    k_ref[...] = qkv[:, dk_p:2 * dk_p].astype(k_ref.dtype)
    v_ref[...] = qkv[:, 2 * dk_p:2 * dk_p + dv_p].astype(v_ref.dtype)


# ---------------------------------------------------------------------------
# Kernel 2: causal flash attention with online softmax.
# grid = (num_q_tiles, num_kv_tiles); kv axis is the reduction ("arbitrary").
# block_q == block_kv, so the diagonal tile is exactly kj == qi.
# ---------------------------------------------------------------------------
def _flash_attn_kernel(q_ref, k_ref, v_ref, o_ref, m_scr, l_scr):
    qi = pl.program_id(0)
    kj = pl.program_id(1)

    @pl.when(kj == 0)
    def _init():
        m_scr[...] = jnp.full(m_scr.shape, -jnp.inf, dtype=m_scr.dtype)
        l_scr[...] = jnp.zeros(l_scr.shape, dtype=l_scr.dtype)
        o_ref[...] = jnp.zeros(o_ref.shape, dtype=o_ref.dtype)

    def _scores():
        # Contract last axes directly -- no materialized K^T / XLU transpose.
        return lax.dot_general(q_ref[...], k_ref[...],
                               (((1,), (1,)), ((), ())),
                               preferred_element_type=jnp.float32)

    def _online_softmax_update(s):
        m_prev = m_scr[...]
        m_new = jnp.maximum(m_prev, jnp.max(s, axis=-1, keepdims=True))
        alpha = jnp.exp(m_prev - m_new)
        p = jnp.exp(s - m_new)
        l_scr[...] = alpha * l_scr[...] + jnp.sum(p, axis=-1, keepdims=True)
        # Accumulate directly into the (resident, f32) output block.
        o_ref[...] = alpha * o_ref[...] + jnp.dot(
            p.astype(v_ref.dtype), v_ref[...],
            preferred_element_type=jnp.float32)
        m_scr[...] = m_new

    # Tiles strictly below the diagonal: fully unmasked fast path.
    @pl.when(kj < qi)
    def _below_diag():
        _online_softmax_update(_scores())

    # Diagonal tile: apply the causal mask, then finalize (it is the last
    # contributing kv tile for this q tile).  Tiles with kj > qi do nothing
    # (and, via the clamped index_map, fetch nothing).
    @pl.when(kj == qi)
    def _diag_and_finalize():
        s = _scores()
        row = lax.broadcasted_iota(jnp.int32, s.shape, 0)
        col = lax.broadcasted_iota(jnp.int32, s.shape, 1)
        s = jnp.where(row >= col, s, -jnp.inf)
        _online_softmax_update(s)
        # Row 0 of every tile always has at least one unmasked column -> l>0.
        o_ref[...] = o_ref[...] * pl.reciprocal(l_scr[...], approx=True)


# ---------------------------------------------------------------------------
# Wrapper: padding / layout glue + the two pallas_calls.
# ---------------------------------------------------------------------------
def masked_self_attention(x, wq, wk, wv, *, d_k, block_q=512, block_kv=512):
    """Forward pass of MaskedSelfAttention.

    x:  (seq_len, d_model) f32
    wq, wk: (d_k, d_model); wv: (d_v, d_model)   (PyTorch Linear layout)
    Returns Z: (seq_len, d_v) f32.
    """
    seq_len, d_model = x.shape
    d_v = wv.shape[0]
    scaling = math.sqrt(d_k)

    # Lane-friendly padded feature dims (multiples of 128).
    dm_p = _round_up(d_model, 128)
    dk_p = _round_up(d_k, 128)
    dv_p = _round_up(d_v, 128)

    # Tiling hygiene: single block size for q and kv (minimal seq padding),
    # clamped to a multiple of 16 (bf16 sublane packing).
    # NOTE: 512 is sized for v6e/v7x (compute-bound); on v5e ~256 is enough.
    block = min(block_q, block_kv, _round_up(seq_len, 16))
    s_p = _round_up(seq_len, block)
    num_seq = s_p // block

    # Zero-pad x (kept f32; the bf16 cast happens inside kernel 1).
    x_p = x
    if (s_p, dm_p) != (seq_len, d_model):
        x_p = jnp.pad(x, ((0, s_p - seq_len), (0, dm_p - d_model)))

    # Fused projection weight: [Wq^T / sqrt(d_k) | Wk^T | Wv^T], padded, bf16.
    def _prep(w, out_p, scale=1.0):
        return jnp.pad(w.T * scale,
                       ((0, dm_p - d_model), (0, out_p - w.shape[0])))

    w_fused = jnp.concatenate(
        [_prep(wq, dk_p, 1.0 / scaling), _prep(wk, dk_p), _prep(wv, dv_p)],
        axis=1).astype(jnp.bfloat16)                      # (dm_p, 2*dk_p+dv_p)

    # --- Kernel 1: fused Q/K/V projection (computed once) -------------------
    q_p, k_p, v_p = pl.pallas_call(
        functools.partial(_qkv_proj_kernel, dk_p=dk_p, dv_p=dv_p),
        out_shape=(
            jax.ShapeDtypeStruct((s_p, dk_p), jnp.bfloat16),
            jax.ShapeDtypeStruct((s_p, dk_p), jnp.bfloat16),
            jax.ShapeDtypeStruct((s_p, dv_p), jnp.bfloat16),
        ),
        grid=(num_seq,),
        in_specs=[
            pl.BlockSpec((block, dm_p), lambda i: (i, 0)),
            pl.BlockSpec((dm_p, 2 * dk_p + dv_p), lambda i: (0, 0)),
        ],
        out_specs=(
            pl.BlockSpec((block, dk_p), lambda i: (i, 0)),
            pl.BlockSpec((block, dk_p), lambda i: (i, 0)),
            pl.BlockSpec((block, dv_p), lambda i: (i, 0)),
        ),
        compiler_params=pltpu.CompilerParams(
            dimension_semantics=("parallel",)),
    )(x_p, w_fused)

    # --- Kernel 2: causal flash attention ------------------------------------
    # K/V index_maps are clamped to the last contributing kv tile (== qi since
    # block_q == block_kv), so masked-out grid steps issue no new K/V DMA.
    out_p = pl.pallas_call(
        _flash_attn_kernel,
        out_shape=jax.ShapeDtypeStruct((s_p, dv_p), jnp.float32),
        grid=(num_seq, num_seq),
        in_specs=[
            pl.BlockSpec((block, dk_p), lambda i, j: (i, 0)),
            pl.BlockSpec((block, dk_p), lambda i, j: (jnp.minimum(j, i), 0)),
            pl.BlockSpec((block, dv_p), lambda i, j: (jnp.minimum(j, i), 0)),
        ],
        out_specs=pl.BlockSpec((block, dv_p), lambda i, j: (i, 0)),
        scratch_shapes=[
            pltpu.VMEM((block, 1), jnp.float32),   # running max m
            pltpu.VMEM((block, 1), jnp.float32),   # running denom l
        ],
        compiler_params=pltpu.CompilerParams(
            dimension_semantics=("parallel", "arbitrary")),
    )(q_p, k_p, v_p)

    # TODO(synk): dropout on the attention weights is identity here (eval-mode
    # semantics); training-mode dropout would use pltpu.prng_seed/prng_random_bits.
    # TODO(synk): for very long sequences the ~S^2/2 skipped grid steps could be
    # removed entirely with a flattened lower-triangular grid via
    # PrefetchScalarGridSpec (kept 2-D here to preserve the "parallel" q axis
    # for v7x megacore sharding).
    return out_p[:seq_len, :d_v]


# ---------------------------------------------------------------------------
# Plain-JAX reference + init (matches the PyTorch module).
# ---------------------------------------------------------------------------
def xavier_uniform(key, out_features, in_features):
    bound = math.sqrt(6.0 / (in_features + out_features))
    return jax.random.uniform(
        key, (out_features, in_features), jnp.float32, minval=-bound, maxval=bound
    )


def reference(x, wq, wk, wv, d_k):
    q = x @ wq.T
    k = x @ wk.T
    v = x @ wv.T
    scores = (q @ k.T) / math.sqrt(d_k)
    s = x.shape[0]
    mask = jnp.tril(jnp.ones((s, s))) == 0
    scores = jnp.where(mask, -jnp.inf, scores)
    w = jax.nn.softmax(scores, axis=1)
    return w @ v


if __name__ == "__main__":
    # Module hyperparams (small shapes consistent with the forward pass).
    d_model = 32
    d_k = 16
    d_v = 16
    seq_len = 8
    n_embeddings_max = 16   # only the top-left (seq_len, seq_len) of tril is used
    p_dropout = 0.1         # identity in eval mode

    key = jax.random.PRNGKey(0)
    kx, kq, kk, kv = jax.random.split(key, 4)

    x = jax.random.normal(kx, (seq_len, d_model), jnp.float32)
    wq = xavier_uniform(kq, d_k, d_model)
    wk = xavier_uniform(kk, d_k, d_model)
    wv = xavier_uniform(kv, d_v, d_model)

    attn = jax.jit(functools.partial(masked_self_attention, d_k=d_k))
    z = jax.block_until_ready(attn(x, wq, wk, wv))

    z_ref = reference(x, wq, wk, wv, d_k)
    assert z.shape == (seq_len, d_v)
    max_diff = float(jnp.max(jnp.abs(z - z_ref)))
    # bf16 MXU operands + approx reciprocal -> slightly looser tolerance.
    assert jnp.allclose(z, z_ref, atol=3e-2, rtol=3e-2), (
        f"mismatch vs reference, max abs diff = {max_diff}")

    print("KERNEL_OK")
</pallas_src>

<mosaic_0001>
module attributes {stable_mosaic.version = 11 : i64} {
  func.func @_qkv_proj_kernel(%arg0: i32, %arg1: memref<16x128xf32, #tpu.memory_space<vmem>>, %arg2: memref<128x384xbf16, #tpu.memory_space<vmem>>, %arg3: memref<16x128xbf16, #tpu.memory_space<vmem>>, %arg4: memref<16x128xbf16, #tpu.memory_space<vmem>>, %arg5: memref<16x128xbf16, #tpu.memory_space<vmem>>) attributes {dimension_semantics = [#tpu.dimension_semantics<parallel>], iteration_bounds = array<i64: 1>, scalar_prefetch = 0 : i64, scratch_operands = 0 : i64, tpu.core_type = #tpu.core_type<tc>, window_params = [{transform_indices = @transform_0, window_bounds = array<i64: 16, 128>}, {pipeline_mode = #tpu.pipeline_mode<synchronous>, transform_indices = @transform_1, window_bounds = array<i64: 128, 384>}, {transform_indices = @transform_2, window_bounds = array<i64: 16, 128>}, {transform_indices = @transform_3, window_bounds = array<i64: 16, 128>}, {transform_indices = @transform_4, window_bounds = array<i64: 16, 128>}]} {
    %c0 = arith.constant 0 : index
    %c0_0 = arith.constant 0 : index
    %0 = vector.load %arg1[%c0, %c0_0] : memref<16x128xf32, #tpu.memory_space<vmem>>, vector<16x128xf32>
    %1 = arith.truncf %0 : vector<16x128xf32> to vector<16x128xbf16>
    %c0_1 = arith.constant 0 : index
    %c0_2 = arith.constant 0 : index
    %2 = vector.load %arg2[%c0_1, %c0_2] : memref<128x384xbf16, #tpu.memory_space<vmem>>, vector<128x384xbf16>
    %cst = arith.constant dense<0.000000e+00> : vector<16x384xf32>
    %3 = tpu.matmul %1, %2, %cst {dimension_numbers = #tpu.dot_dimension_numbers<[1], [0], [0], [1], [0, 0, 1, 1], [], []>} : vector<16x128xbf16>, vector<128x384xbf16>, vector<16x384xf32> -> vector<16x384xf32>
    %4 = vector.extract_strided_slice %3 {offsets = [0, 0], sizes = [16, 128], strides = [1, 1]} : vector<16x384xf32> to vector<16x128xf32>
    %5 = arith.truncf %4 : vector<16x128xf32> to vector<16x128xbf16>
    %c0_3 = arith.constant 0 : index
    %c0_4 = arith.constant 0 : index
    %6 = vector.load %arg3[%c0_3, %c0_4] : memref<16x128xbf16, #tpu.memory_space<vmem>>, vector<16x128xbf16>
    tpu.vector_store %arg3[%c0_3, %c0_4], %5 {strides = array<i32>} : memref<16x128xbf16, #tpu.memory_space<vmem>>, vector<16x128xbf16>,
    %7 = vector.extract_strided_slice %3 {offsets = [0, 128], sizes = [16, 128], strides = [1, 1]} : vector<16x384xf32> to vector<16x128xf32>
    %8 = arith.truncf %7 : vector<16x128xf32> to vector<16x128xbf16>
    %c0_5 = arith.constant 0 : index
    %c0_6 = arith.constant 0 : index
    %9 = vector.load %arg4[%c0_5, %c0_6] : memref<16x128xbf16, #tpu.memory_space<vmem>>, vector<16x128xbf16>
    tpu.vector_store %arg4[%c0_5, %c0_6], %8 {strides = array<i32>} : memref<16x128xbf16, #tpu.memory_space<vmem>>, vector<16x128xbf16>,
    %10 = vector.extract_strided_slice %3 {offsets = [0, 256], sizes = [16, 128], strides = [1, 1]} : vector<16x384xf32> to vector<16x128xf32>
    %11 = arith.truncf %10 : vector<16x128xf32> to vector<16x128xbf16>
    %c0_7 = arith.constant 0 : index
    %c0_8 = arith.constant 0 : index
    %12 = vector.load %arg5[%c0_7, %c0_8] : memref<16x128xbf16, #tpu.memory_space<vmem>>, vector<16x128xbf16>
    tpu.vector_store %arg5[%c0_7, %c0_8], %11 {strides = array<i32>} : memref<16x128xbf16, #tpu.memory_space<vmem>>, vector<16x128xbf16>,
    return
  }
  func.func @transform_0(%arg0: i32) -> (i32, i32) {
    %c0_i32 = arith.constant 0 : i32
    %c0_i32_0 = arith.constant 0 : i32
    return %arg0, %c0_i32 : i32, i32
  }
  func.func @transform_1(%arg0: i32) -> (i32, i32) {
    %c0_i32 = arith.constant 0 : i32
    %c0_i32_0 = arith.constant 0 : i32
    %c0_i32_1 = arith.constant 0 : i32
    return %c0_i32, %c0_i32_0 : i32, i32
  }
  func.func @transform_2(%arg0: i32) -> (i32, i32) {
    %c0_i32 = arith.constant 0 : i32
    %c0_i32_0 = arith.constant 0 : i32
    return %arg0, %c0_i32 : i32, i32
  }
  func.func @transform_3(%arg0: i32) -> (i32, i32) {
    %c0_i32 = arith.constant 0 : i32
    %c0_i32_0 = arith.constant 0 : i32
    return %arg0, %c0_i32 : i32, i32
  }
  func.func @transform_4(%arg0: i32) -> (i32, i32) {
    %c0_i32 = arith.constant 0 : i32
    %c0_i32_0 = arith.constant 0 : i32
    return %arg0, %c0_i32 : i32, i32
  }
}

module attributes {stable_mosaic.version = 11 : i64} {
  func.func @_flash_attn_kernel(%arg0: i32, %arg1: i32, %arg2: memref<16x128xbf16, #tpu.memory_space<vmem>>, %arg3: memref<16x128xbf16, #tpu.memory_space<vmem>>, %arg4: memref<16x128xbf16, #tpu.memory_space<vmem>>, %arg5: memref<16x128xf32, #tpu.memory_space<vmem>>, %arg6: memref<16x1xf32, #tpu.memory_space<vmem>>, %arg7: memref<16x1xf32, #tpu.memory_space<vmem>>) attributes {dimension_semantics = [#tpu.dimension_semantics<parallel>, #tpu.dimension_semantics<arbitrary>], iteration_bounds = array<i64: 1, 1>, scalar_prefetch = 0 : i64, scratch_operands = 2 : i64, tpu.core_type = #tpu.core_type<tc>, window_params = [{transform_indices = @transform_0, window_bounds = array<i64: 16, 128>}, {transform_indices = @transform_1, window_bounds = array<i64: 16, 128>}, {transform_indices = @transform_2, window_bounds = array<i64: 16, 128>}, {transform_indices = @transform_3, window_bounds = array<i64: 16, 128>}]} {
    %c0_i32 = arith.constant 0 : i32
    %0 = arith.cmpi eq, %arg1, %c0_i32 : i32
    %1 = arith.extui %0 : i1 to i32
    %c0_i32_0 = arith.constant 0 : i32
    %2 = arith.cmpi ne, %1, %c0_i32_0 : i32
    scf.if %2 {
      %cst = arith.constant 0xFF800000 : f32
      %9 = vector.broadcast %cst : f32 to vector<16x1xf32>
      %c0 = arith.constant 0 : index
      %c0_3 = arith.constant 0 : index
      %10 = vector.load %arg6[%c0, %c0_3] : memref<16x1xf32, #tpu.memory_space<vmem>>, vector<16x1xf32>
      tpu.vector_store %arg6[%c0, %c0_3], %9 {strides = array<i32>} : memref<16x1xf32, #tpu.memory_space<vmem>>, vector<16x1xf32>,
      %cst_4 = arith.constant 0.000000e+00 : f32
      %11 = vector.broadcast %cst_4 : f32 to vector<16x1xf32>
      %c0_5 = arith.constant 0 : index
      %c0_6 = arith.constant 0 : index
      %12 = vector.load %arg7[%c0_5, %c0_6] : memref<16x1xf32, #tpu.memory_space<vmem>>, vector<16x1xf32>
      tpu.vector_store %arg7[%c0_5, %c0_6], %11 {strides = array<i32>} : memref<16x1xf32, #tpu.memory_space<vmem>>, vector<16x1xf32>,
      %cst_7 = arith.constant 0.000000e+00 : f32
      %13 = vector.broadcast %cst_7 : f32 to vector<16x128xf32>
      %c0_8 = arith.constant 0 : index
      %c0_9 = arith.constant 0 : index
      %14 = vector.load %arg5[%c0_8, %c0_9] : memref<16x128xf32, #tpu.memory_space<vmem>>, vector<16x128xf32>
      tpu.vector_store %arg5[%c0_8, %c0_9], %13 {strides = array<i32>} : memref<16x128xf32, #tpu.memory_space<vmem>>, vector<16x128xf32>,
    } else {
    }
    %3 = arith.cmpi slt, %arg1, %arg0 : i32
    %4 = arith.extui %3 : i1 to i32
    %c0_i32_1 = arith.constant 0 : i32
    %5 = arith.cmpi ne, %4, %c0_i32_1 : i32
    scf.if %5 {
      %c0 = arith.constant 0 : index
      %c0_3 = arith.constant 0 : index
      %9 = vector.load %arg2[%c0, %c0_3] : memref<16x128xbf16, #tpu.memory_space<vmem>>, vector<16x128xbf16>
      %c0_4 = arith.constant 0 : index
      %c0_5 = arith.constant 0 : index
      %10 = vector.load %arg3[%c0_4, %c0_5] : memref<16x128xbf16, #tpu.memory_space<vmem>>, vector<16x128xbf16>
      %cst = arith.constant dense<0.000000e+00> : vector<16x16xf32>
      %11 = tpu.matmul %9, %10, %cst {dimension_numbers = #tpu.dot_dimension_numbers<[1], [1], [0], [0], [0, 0, 1, 0], [], []>} : vector<16x128xbf16>, vector<16x128xbf16>, vector<16x16xf32> -> vector<16x16xf32>
      %c0_6 = arith.constant 0 : index
      %c0_7 = arith.constant 0 : index
      %12 = vector.load %arg6[%c0_6, %c0_7] : memref<16x1xf32, #tpu.memory_space<vmem>>, vector<16x1xf32>
      %cst_8 = arith.constant dense<0xFF800000> : vector<16xf32>
      %13 = vector.multi_reduction <maximumf>, %11, %cst_8 [1] : vector<16x16xf32> to vector<16xf32>
      %14 = vector.shape_cast %13 : vector<16xf32> to vector<16x1xf32>
      %15 = arith.maximumf %12, %14 : vector<16x1xf32>
      %16 = arith.subf %12, %15 : vector<16x1xf32>
      %17 = math.exp %16 : vector<16x1xf32>
      %18 = vector.broadcast %15 : vector<16x1xf32> to vector<16x16xf32>
      %19 = arith.subf %11, %18 : vector<16x16xf32>
      %20 = math.exp %19 : vector<16x16xf32>
      %c0_9 = arith.constant 0 : index
      %c0_10 = arith.constant 0 : index
      %21 = vector.load %arg7[%c0_9, %c0_10] : memref<16x1xf32, #tpu.memory_space<vmem>>, vector<16x1xf32>
      %22 = arith.mulf %17, %21 : vector<16x1xf32>
      %cst_11 = arith.constant dense<0.000000e+00> : vector<16xf32>
      %23 = vector.multi_reduction <add>, %20, %cst_11 [1] : vector<16x16xf32> to vector<16xf32>
      %24 = vector.shape_cast %23 : vector<16xf32> to vector<16x1xf32>
      %25 = arith.addf %22, %24 : vector<16x1xf32>
      %c0_12 = arith.constant 0 : index
      %c0_13 = arith.constant 0 : index
      %26 = vector.load %arg7[%c0_12, %c0_13] : memref<16x1xf32, #tpu.memory_space<vmem>>, vector<16x1xf32>
      tpu.vector_store %arg7[%c0_12, %c0_13], %25 {strides = array<i32>} : memref<16x1xf32, #tpu.memory_space<vmem>>, vector<16x1xf32>,
      %c0_14 = arith.constant 0 : index
      %c0_15 = arith.constant 0 : index
      %27 = vector.load %arg5[%c0_14, %c0_15] : memref<16x128xf32, #tpu.memory_space<vmem>>, vector<16x128xf32>
      %28 = vector.broadcast %17 : vector<16x1xf32> to vector<16x128xf32>
      %29 = arith.mulf %28, %27 : vector<16x128xf32>
      %30 = arith.truncf %20 : vector<16x16xf32> to vector<16x16xbf16>
      %c0_16 = arith.constant 0 : index
      %c0_17 = arith.constant 0 : index
      %31 = vector.load %arg4[%c0_16, %c0_17] : memref<16x128xbf16, #tpu.memory_space<vmem>>, vector<16x128xbf16>
      %cst_18 = arith.constant dense<0.000000e+00> : vector<16x128xf32>
      %32 = tpu.matmul %30, %31, %cst_18 {dimension_numbers = #tpu.dot_dimension_numbers<[1], [0], [0], [1], [0, 0, 1, 1], [], []>} : vector<16x16xbf16>, vector<16x128xbf16>, vector<16x128xf32> -> vector<16x128xf32>
      %33 = arith.addf %29, %32 : vector<16x128xf32>
      %c0_19 = arith.constant 0 : index
      %c0_20 = arith.constant 0 : index
      %34 = vector.load %arg5[%c0_19, %c0_20] : memref<16x128xf32, #tpu.memory_space<vmem>>, vector<16x128xf32>
      tpu.vector_store %arg5[%c0_19, %c0_20], %33 {strides = array<i32>} : memref<16x128xf32, #tpu.memory_space<vmem>>, vector<16x128xf32>,
      %c0_21 = arith.constant 0 : index
      %c0_22 = arith.constant 0 : index
      %35 = vector.load %arg6[%c0_21, %c0_22] : memref<16x1xf32, #tpu.memory_space<vmem>>, vector<16x1xf32>
      tpu.vector_store %arg6[%c0_21, %c0_22], %15 {strides = array<i32>} : memref<16x1xf32, #tpu.memory_space<vmem>>, vector<16x1xf32>,
    } else {
    }
    %6 = arith.cmpi eq, %arg1, %arg0 : i32
    %7 = arith.extui %6 : i1 to i32
    %c0_i32_2 = arith.constant 0 : i32
    %8 = arith.cmpi ne, %7, %c0_i32_2 : i32
    scf.if %8 {
      %c0 = arith.constant 0 : index
      %c0_3 = arith.constant 0 : index
      %9 = vector.load %arg2[%c0, %c0_3] : memref<16x128xbf16, #tpu.memory_space<vmem>>, vector<16x128xbf16>
      %c0_4 = arith.constant 0 : index
      %c0_5 = arith.constant 0 : index
      %10 = vector.load %arg3[%c0_4, %c0_5] : memref<16x128xbf16, #tpu.memory_space<vmem>>, vector<16x128xbf16>
      %cst = arith.constant dense<0.000000e+00> : vector<16x16xf32>
      %11 = tpu.matmul %9, %10, %cst {dimension_numbers = #tpu.dot_dimension_numbers<[1], [1], [0], [0], [0, 0, 1, 0], [], []>} : vector<16x128xbf16>, vector<16x128xbf16>, vector<16x16xf32> -> vector<16x16xf32>
      %12 = tpu.iota {dimensions = array<i32: 0>} : vector<16x16xi32>
      %13 = tpu.iota {dimensions = array<i32: 1>} : vector<16x16xi32>
      %14 = arith.cmpi sge, %12, %13 : vector<16x16xi32>
      %cst_6 = arith.constant 0xFF800000 : f32
      %15 = vector.broadcast %cst_6 : f32 to vector<16x16xf32>
      %16 = arith.select %14, %11, %15 : vector<16x16xi1>, vector<16x16xf32>
      %c0_7 = arith.constant 0 : index
      %c0_8 = arith.constant 0 : index
      %17 = vector.load %arg6[%c0_7, %c0_8] : memref<16x1xf32, #tpu.memory_space<vmem>>, vector<16x1xf32>
      %cst_9 = arith.constant dense<0xFF800000> : vector<16xf32>
      %18 = vector.multi_reduction <maximumf>, %16, %cst_9 [1] : vector<16x16xf32> to vector<16xf32>
      %19 = vector.shape_cast %18 : vector<16xf32> to vector<16x1xf32>
      %20 = arith.maximumf %17, %19 : vector<16x1xf32>
      %21 = arith.subf %17, %20 : vector<16x1xf32>
      %22 = math.exp %21 : vector<16x1xf32>
      %23 = vector.broadcast %20 : vector<16x1xf32> to vector<16x16xf32>
      %24 = arith.subf %16, %23 : vector<16x16xf32>
      %25 = math.exp %24 : vector<16x16xf32>
      %c0_10 = arith.constant 0 : index
      %c0_11 = arith.constant 0 : index
      %26 = vector.load %arg7[%c0_10, %c0_11] : memref<16x1xf32, #tpu.memory_space<vmem>>, vector<16x1xf32>
      %27 = arith.mulf %22, %26 : vector<16x1xf32>
      %cst_12 = arith.constant dense<0.000000e+00> : vector<16xf32>
      %28 = vector.multi_reduction <add>, %25, %cst_12 [1] : vector<16x16xf32> to vector<16xf32>
      %29 = vector.shape_cast %28 : vector<16xf32> to vector<16x1xf32>
      %30 = arith.addf %27, %29 : vector<16x1xf32>
      %c0_13 = arith.constant 0 : index
      %c0_14 = arith.constant 0 : index
      %31 = vector.load %arg7[%c0_13, %c0_14] : memref<16x1xf32, #tpu.memory_space<vmem>>, vector<16x1xf32>
      tpu.vector_store %arg7[%c0_13, %c0_14], %30 {strides = array<i32>} : memref<16x1xf32, #tpu.memory_space<vmem>>, vector<16x1xf32>,
      %c0_15 = arith.constant 0 : index
      %c0_16 = arith.constant 0 : index
      %32 = vector.load %arg5[%c0_15, %c0_16] : memref<16x128xf32, #tpu.memory_space<vmem>>, vector<16x128xf32>
      %33 = vector.broadcast %22 : vector<16x1xf32> to vector<16x128xf32>
      %34 = arith.mulf %33, %32 : vector<16x128xf32>
      %35 = arith.truncf %25 : vector<16x16xf32> to vector<16x16xbf16>
      %c0_17 = arith.constant 0 : index
      %c0_18 = arith.constant 0 : index
      %36 = vector.load %arg4[%c0_17, %c0_18] : memref<16x128xbf16, #tpu.memory_space<vmem>>, vector<16x128xbf16>
      %cst_19 = arith.constant dense<0.000000e+00> : vector<16x128xf32>
      %37 = tpu.matmul %35, %36, %cst_19 {dimension_numbers = #tpu.dot_dimension_numbers<[1], [0], [0], [1], [0, 0, 1, 1], [], []>} : vector<16x16xbf16>, vector<16x128xbf16>, vector<16x128xf32> -> vector<16x128xf32>
      %38 = arith.addf %34, %37 : vector<16x128xf32>
      %c0_20 = arith.constant 0 : index
      %c0_21 = arith.constant 0 : index
      %39 = vector.load %arg5[%c0_20, %c0_21] : memref<16x128xf32, #tpu.memory_space<vmem>>, vector<16x128xf32>
      tpu.vector_store %arg5[%c0_20, %c0_21], %38 {strides = array<i32>} : memref<16x128xf32, #tpu.memory_space<vmem>>, vector<16x128xf32>,
      %c0_22 = arith.constant 0 : index
      %c0_23 = arith.constant 0 : index
      %40 = vector.load %arg6[%c0_22, %c0_23] : memref<16x1xf32, #tpu.memory_space<vmem>>, vector<16x1xf32>
      tpu.vector_store %arg6[%c0_22, %c0_23], %20 {strides = array<i32>} : memref<16x1xf32, #tpu.memory_space<vmem>>, vector<16x1xf32>,
      %c0_24 = arith.constant 0 : index
      %c0_25 = arith.constant 0 : index
      %41 = vector.load %arg5[%c0_24, %c0_25] : memref<16x128xf32, #tpu.memory_space<vmem>>, vector<16x128xf32>
      %c0_26 = arith.constant 0 : index
      %c0_27 = arith.constant 0 : index
      %42 = vector.load %arg7[%c0_26, %c0_27] : memref<16x1xf32, #tpu.memory_space<vmem>>, vector<16x1xf32>
      %43 = tpu.reciprocal %42 {approx = true} : vector<16x1xf32> -> vector<16x1xf32>
      %44 = vector.broadcast %43 : vector<16x1xf32> to vector<16x128xf32>
      %45 = arith.mulf %41, %44 : vector<16x128xf32>
      %c0_28 = arith.constant 0 : index
      %c0_29 = arith.constant 0 : index
      %46 = vector.load %arg5[%c0_28, %c0_29] : memref<16x128xf32, #tpu.memory_space<vmem>>, vector<16x128xf32>
      tpu.vector_store %arg5[%c0_28, %c0_29], %45 {strides = array<i32>} : memref<16x128xf32, #tpu.memory_space<vmem>>, vector<16x128xf32>,
    } else {
    }
    return
  }
  func.func @transform_0(%arg0: i32, %arg1: i32) -> (i32, i32) {
    %c0_i32 = arith.constant 0 : i32
    %c0_i32_0 = arith.constant 0 : i32
    return %arg0, %c0_i32 : i32, i32
  }
  func.func @transform_1(%arg0: i32, %arg1: i32) -> (i32, i32) {
    %0 = arith.minsi %arg1, %arg0 : i32
    %c0_i32 = arith.constant 0 : i32
    %c0_i32_0 = arith.constant 0 : i32
    return %0, %c0_i32 : i32, i32
  }
  func.func @transform_2(%arg0: i32, %arg1: i32) -> (i32, i32) {
    %0 = arith.minsi %arg1, %arg0 : i32
    %c0_i32 = arith.constant 0 : i32
    %c0_i32_0 = arith.constant 0 : i32
    return %0, %c0_i32 : i32, i32
  }
  func.func @transform_3(%arg0: i32, %arg1: i32) -> (i32, i32) {
    %c0_i32 = arith.constant 0 : i32
    %c0_i32_0 = arith.constant 0 : i32
    return %arg0, %c0_i32 : i32, i32
  }
}

</mosaic_0001>

<llo_original>
// kernel: masked_self_attention.2
$region0: #{masked_self_attention.2}
  #allocation0 [shape = 'u32[]', space=smem, size = 0x4, offset = 0x4, fixed_abs, tag = 'smem constant byte address 0x4 - core index']
  #allocation1 [shape = 'u32[144,128]{1,0:T(1,128)}', space=vmem, size = 0x12000, scoped, tag = 'internal scratch']
  %s0 = inlined_call_operand.vmem [shape: f32[16,128], index: 0, kind: input, shape index: {}]
  %s1 = inlined_call_operand.vmem [shape: bf16[128,384], index: 1, kind: input, shape index: {}]
  %s2 = inlined_call_operand.vmem [shape: bf16[16,128], index: 2, kind: output, shape index: {0}]
  %s3 = inlined_call_operand.vmem [shape: bf16[16,128], index: 3, kind: output, shape index: {1}]
  %s4 = inlined_call_operand.vmem [shape: bf16[16,128], index: 4, kind: output, shape index: {2}]
  %5 = xla_tuple %s2, %s3, %s4
  %s6 = sld [smem:[#allocation0]]
  $region34: #{masked_self_attention.2} parent=0
    _
  %s8 = ssub.s32 1, %s6
  %s9 = scalar_select 0, %s8, %s6
  // Predicated region
  $region2: #{masked_self_attention.2} parent=0 // pred_check
    _
  $region3: #{masked_self_attention.2} parent=0 // pred_check_branch
    %11 = sbr.rel (0) target = $region5
  $region4: #{masked_self_attention.2} parent=0 // pred_region
    _
  $region5: #{masked_self_attention.2} parent=0 // pred_fallthru
    _
  // Predicated region
  $region6: #{masked_self_attention.2} parent=0 // pred_check
    _
  $region7: #{masked_self_attention.2} parent=0 // pred_check_branch
    %13 = sbr.rel (0) target = $region9
  $region8: #{masked_self_attention.2} parent=0 // pred_region
    _
  $region9: #{masked_self_attention.2} parent=0 // pred_fallthru
    _
  %v15 = vld [vmem:[%s0] sm:$0xff]
  %v16 = vld [vmem:[%s0 + $0x8] sm:$0xff]
  %v17 = vpack.c.bf16 %v16, %v15
  %v18 = vld [vmem:[%s1] sm:$0xff]
  %v19 = vld [vmem:[%s1 + $0x8] sm:$0xf]
  %v20 = vld [vmem:[%s1 + $0xc] sm:$0xff]
  %v21 = vld [vmem:[%s1 + $0x14] sm:$0xf]
  %v22 = vld [vmem:[%s1 + $0x18] sm:$0xff]
  %v23 = vld [vmem:[%s1 + $0x20] sm:$0xf]
  %v24 = vld [vmem:[%s1 + $0x24] sm:$0xff]
  %v25 = vld [vmem:[%s1 + $0x2c] sm:$0xf]
  %v26 = vld [vmem:[%s1 + $0x30] sm:$0xff]
  %v27 = vld [vmem:[%s1 + $0x38] sm:$0xf]
  %v28 = vld [vmem:[%s1 + $0x3c] sm:$0xff]
  %v29 = vld [vmem:[%s1 + $0x44] sm:$0xf]
  %v30 = vld [vmem:[%s1 + $0x48] sm:$0xff]
  %v31 = vld [vmem:[%s1 + $0x50] sm:$0xf]
  %v32 = vld [vmem:[%s1 + $0x54] sm:$0xff]
  %v33 = vld [vmem:[%s1 + $0x5c] sm:$0xf]
  %v34 = vld [vmem:[%s1 + $0x60] sm:$0xff]
  %v35 = vld [vmem:[%s1 + $0x68] sm:$0xf]
  %v36 = vld [vmem:[%s1 + $0x6c] sm:$0xff]
  %v37 = vld [vmem:[%s1 + $0x74] sm:$0xf]
  %v38 = vld [vmem:[%s1 + $0x78] sm:$0xff]
  %v39 = vld [vmem:[%s1 + $0x80] sm:$0xf]
  %v40 = vld [vmem:[%s1 + $0x84] sm:$0xff]
  %v41 = vld [vmem:[%s1 + $0x8c] sm:$0xf]
  %v42 = vld [vmem:[%s1 + $0x90] sm:$0xff]
  %v43 = vld [vmem:[%s1 + $0x98] sm:$0xf]
  %v44 = vld [vmem:[%s1 + $0x9c] sm:$0xff]
  %v45 = vld [vmem:[%s1 + $0xa4] sm:$0xf]
  %v46 = vld [vmem:[%s1 + $0xa8] sm:$0xff]
  %v47 = vld [vmem:[%s1 + $0xb0] sm:$0xf]
  %v48 = vld [vmem:[%s1 + $0xb4] sm:$0xff]
  %v49 = vld [vmem:[%s1 + $0xbc] sm:$0xf]
  %v82 = vunpack.c.l.b16 %v18
  %v83 = vunpack.c.h.b16 %v18
  %v84 = vunpack.c.l.b16 %v19
  %v85 = vunpack.c.l.b16 %v20
  %v86 = vunpack.c.h.b16 %v20
  %v87 = vunpack.c.l.b16 %v21
  %v88 = vunpack.c.l.b16 %v22
  %v89 = vunpack.c.h.b16 %v22
  %v90 = vunpack.c.l.b16 %v23
  %v91 = vunpack.c.l.b16 %v24
  %v92 = vunpack.c.h.b16 %v24
  %v93 = vunpack.c.l.b16 %v25
  %v94 = vunpack.c.l.b16 %v26
  %v95 = vunpack.c.h.b16 %v26
  %v96 = vunpack.c.l.b16 %v27
  %v97 = vunpack.c.l.b16 %v28
  %v98 = vunpack.c.h.b16 %v28
  %v99 = vunpack.c.l.b16 %v29
  %v100 = vunpack.c.l.b16 %v30
  %v101 = vunpack.c.h.b16 %v30
  %v102 = vunpack.c.l.b16 %v31
  %v103 = vunpack.c.l.b16 %v32
  %v104 = vunpack.c.h.b16 %v32
  %v105 = vunpack.c.l.b16 %v33
  %v106 = vunpack.c.l.b16 %v34
  %v107 = vunpack.c.h.b16 %v34
  %v108 = vunpack.c.l.b16 %v35
  %v109 = vunpack.c.l.b16 %v36
  %v110 = vunpack.c.h.b16 %v36
  %v111 = vunpack.c.l.b16 %v37
  %v112 = vunpack.c.l.b16 %v38
  %v113 = vunpack.c.h.b16 %v38
  %v114 = vunpack.c.l.b16 %v39
  %v115 = vunpack.c.l.b16 %v40
  %v116 = vunpack.c.h.b16 %v40
  %v117 = vunpack.c.l.b16 %v41
  %v118 = vunpack.c.l.b16 %v42
  %v119 = vunpack.c.h.b16 %v42
  %v120 = vunpack.c.l.b16 %v43
  %v121 = vunpack.c.l.b16 %v44
  %v122 = vunpack.c.h.b16 %v44
  %v123 = vunpack.c.l.b16 %v45
  %v124 = vunpack.c.l.b16 %v46
  %v125 = vunpack.c.h.b16 %v46
  %v126 = vunpack.c.l.b16 %v47
  %v127 = vunpack.c.l.b16 %v48
  %v128 = vunpack.c.h.b16 %v48
  %v129 = vunpack.c.l.b16 %v49
  %v130 = vpack.c.b16 %v85, %v82
  %v131 = vpack.c.b16 %v86, %v83
  %v132 = vpack.c.b16 %v87, %v84
  %v133 = vpack.c.b16 %v91, %v88
  %v134 = vpack.c.b16 %v92, %v89
  %v135 = vpack.c.b16 %v93, %v90
  %v136 = vpack.c.b16 %v97, %v94
  %v137 = vpack.c.b16 %v98, %v95
  %v138 = vpack.c.b16 %v99, %v96
  %v139 = vpack.c.b16 %v103, %v100
  %v140 = vpack.c.b16 %v104, %v101
  %v141 = vpack.c.b16 %v105, %v102
  %v142 = vpack.c.b16 %v109, %v106
  %v143 = vpack.c.b16 %v110, %v107
  %v144 = vpack.c.b16 %v111, %v108
  %v145 = vpack.c.b16 %v115, %v112
  %v146 = vpack.c.b16 %v116, %v113
  %v147 = vpack.c.b16 %v117, %v114
  %v148 = vpack.c.b16 %v121, %v118
  %v149 = vpack.c.b16 %v122, %v119
  %v150 = vpack.c.b16 %v123, %v120
  %v151 = vpack.c.b16 %v127, %v124
  %v152 = vpack.c.b16 %v128, %v125
  %v153 = vpack.c.b16 %v129, %v126
  %178 = vmatprep.subr.bf16.mxu0 %v152
  %179 = vmatpush1.bf16.msra.mxu0 %v151
  %180 = vmatprep.subr.bf16.mxu0 %v149
  %181 = vmatpush1.bf16.msra.mxu0 %v148
  %182 = vmatprep.subr.bf16.mxu0 %v146
  %183 = vmatpush1.bf16.msra.mxu0 %v145
  %184 = vmatprep.subr.bf16.mxu0 %v143
  %185 = vmatpush1.bf16.msra.mxu0 %v142
  %186 = vmatprep.subr.bf16.mxu0 %v140
  %187 = vmatpush1.bf16.msra.mxu0 %v139
  %188 = vmatprep.subr.bf16.mxu0 %v137
  %189 = vmatpush1.bf16.msra.mxu0 %v136
  %190 = vmatprep.subr.bf16.mxu0 %v134
  %191 = vmatpush1.bf16.msra.mxu0 %v133
  %192 = vmatprep.subr.bf16.mxu0 %v131
  %193 = vmatpush1.bf16.msra.mxu0 %v130
  %194 = vmatprep.subr.bf16.mxu0 0
  %195 = vmatpush2.bf16.msra.mxu0 0
  %196 = vmatprep.subr.bf16.mxu0 0
  %197 = vmatpush2.bf16.msra.mxu0 0
  %198 = vmatprep.subr.bf16.mxu0 0
  %199 = vmatpush2.bf16.msra.mxu0 0
  %200 = vmatprep.subr.bf16.mxu0 0
  %201 = vmatpush2.bf16.msra.mxu0 0
  %202 = vmatprep.subr.bf16.mxu0 0
  %203 = vmatpush2.bf16.msra.mxu0 0
  %204 = vmatprep.subr.bf16.mxu0 0
  %205 = vmatpush2.bf16.msra.mxu0 0
  %206 = vmatprep.subr.bf16.mxu0 0
  %207 = vmatpush2.bf16.msra.mxu0 0
  %208 = vmatprep.subr.bf16.mxu0 0
  %209 = vmatpush2.bf16.msra.mxu0 0
  %210 = vmatprep.mubr.bf16.mxu0 0
  %211 = vmatmul.mubr.bf16.gmra.mxu0 %v17
  %v212 = vpop.f32.mrf.mxu0
  %v213 = vadd.f32 0.0, %v212
  %v214 = vpop.f32.mrf.mxu0
  %v215 = vadd.f32 0.0, %v214
  %v216 = vpop.f32.mrf.mxu0
  %v217 = vadd.f32 0.0, %v216
  %v218 = vpop.f32.mrf.mxu0
  %v219 = vadd.f32 0.0, %v218
  %220 = vdwg.mxu0
  %221 = vmatprep.subr.bf16.mxu0 0
  %222 = vmatpush1.bf16.msra.mxu0 %v153
  %223 = vmatprep.subr.bf16.mxu0 0
  %224 = vmatpush1.bf16.msra.mxu0 %v150
  %225 = vmatprep.subr.bf16.mxu0 0
  %226 = vmatpush1.bf16.msra.mxu0 %v147
  %227 = vmatprep.subr.bf16.mxu0 0
  %228 = vmatpush1.bf16.msra.mxu0 %v144
  %229 = vmatprep.subr.bf16.mxu0 0
  %230 = vmatpush1.bf16.msra.mxu0 %v141
  %231 = vmatprep.subr.bf16.mxu0 0
  %232 = vmatpush1.bf16.msra.mxu0 %v138
  %233 = vmatprep.subr.bf16.mxu0 0
  %234 = vmatpush1.bf16.msra.mxu0 %v135
  %235 = vmatprep.subr.bf16.mxu0 0
  %236 = vmatpush1.bf16.msra.mxu0 %v132
  %237 = vmatprep.subr.bf16.mxu0 0
  %238 = vmatpush2.bf16.msra.mxu0 0
  %239 = vmatprep.subr.bf16.mxu0 0
  %240 = vmatpush2.bf16.msra.mxu0 0
  %241 = vmatprep.subr.bf16.mxu0 0
  %242 = vmatpush2.bf16.msra.mxu0 0
  %243 = vmatprep.subr.bf16.mxu0 0
  %244 = vmatpush2.bf16.msra.mxu0 0
  %245 = vmatprep.subr.bf16.mxu0 0
  %246 = vmatpush2.bf16.msra.mxu0 0
  %247 = vmatprep.subr.bf16.mxu0 0
  %248 = vmatpush2.bf16.msra.mxu0 0
  %249 = vmatprep.subr.bf16.mxu0 0
  %250 = vmatpush2.bf16.msra.mxu0 0
  %251 = vmatprep.subr.bf16.mxu0 0
  %252 = vmatpush2.bf16.msra.mxu0 0
  %253 = vmatprep.mubr.bf16.mxu0 0
  %254 = vmatmul.mubr.bf16.gmra.mxu0 %v17
  %v255 = vpop.f32.mrf.mxu0
  %v256 = vadd.f32 0.0, %v255
  %v257 = vpop.f32.mrf.mxu0
  %v258 = vpop.f32.mrf.mxu0
  %v259 = vadd.f32 0.0, %v258
  %v260 = vpop.f32.mrf.mxu0
  %261 = vdwg.mxu0
  %v262 = vpack.c.bf16 %v217, %v213
  %v264 = vunpack.c.l.b16 %v262
  %v265 = vunpack.c.h.b16 %v262
  %v266 = vpack.c.b16 %v264, %v264
  %v267 = vpack.c.b16 %v265, %v265
  %270 = vst [vmem:[%s2] sm:$0xf] %v266
  %271 = vst [vmem:[%s2 + $0x4] sm:$0xf] %v267
  %v272 = vpack.c.bf16 %v219, %v215
  %v274 = vunpack.c.l.b16 %v272
  %v275 = vunpack.c.h.b16 %v272
  %v276 = vpack.c.b16 %v274, %v274
  %v277 = vpack.c.b16 %v275, %v275
  %280 = vst [vmem:[%s3] sm:$0xf] %v276
  %281 = vst [vmem:[%s3 + $0x4] sm:$0xf] %v277
  %v282 = vpack.c.bf16 %v259, %v256
  %v284 = vunpack.c.l.b16 %v282
  %v285 = vunpack.c.h.b16 %v282
  %v286 = vpack.c.b16 %v284, %v284
  %v287 = vpack.c.b16 %v285, %v285
  %290 = vst [vmem:[%s4] sm:$0xf] %v286
  %291 = vst [vmem:[%s4 + $0x4] sm:$0xf] %v287
  // Predicated region
  $region10: #{masked_self_attention.2} parent=0 // pred_check
    _
  $region11: #{masked_self_attention.2} parent=0 // pred_check_branch
    %293 = sbr.rel (0) target = $region13
  $region12: #{masked_self_attention.2} parent=0 // pred_region
    _
  $region13: #{masked_self_attention.2} parent=0 // pred_fallthru
    _
  // Predicated region
  $region14: #{masked_self_attention.2} parent=0 // pred_check
    _
  $region15: #{masked_self_attention.2} parent=0 // pred_check_branch
    %295 = sbr.rel (0) target = $region17
  $region16: #{masked_self_attention.2} parent=0 // pred_region
    _
  $region17: #{masked_self_attention.2} parent=0 // pred_fallthru
    _
  // Predicated region
  $region18: #{masked_self_attention.2} parent=0 // pred_check
    _
  $region19: #{masked_self_attention.2} parent=0 // pred_check_branch
    %297 = sbr.rel (0) target = $region21
  $region20: #{masked_self_attention.2} parent=0 // pred_region
    _
  $region21: #{masked_self_attention.2} parent=0 // pred_fallthru
    _
  // Predicated region
  $region22: #{masked_self_attention.2} parent=0 // pred_check
    _
  $region23: #{masked_self_attention.2} parent=0 // pred_check_branch
    %299 = sbr.rel (0) target = $region25
  $region24: #{masked_self_attention.2} parent=0 // pred_region
    _
  $region25: #{masked_self_attention.2} parent=0 // pred_fallthru
    _
  // Predicated region
  $region26: #{masked_self_attention.2} parent=0 // pred_check
    _
  $region27: #{masked_self_attention.2} parent=0 // pred_check_branch
    %301 = sbr.rel (0) target = $region29
  $region28: #{masked_self_attention.2} parent=0 // pred_region
    _
  $region29: #{masked_self_attention.2} parent=0 // pred_fallthru
    _
  // Predicated region
  $region30: #{masked_self_attention.2} parent=0 // pred_check
    _
  $region31: #{masked_self_attention.2} parent=0 // pred_check_branch
    %303 = sbr.rel (0) target = $region33
  $region32: #{masked_self_attention.2} parent=0 // pred_region
    _
  $region33: #{masked_self_attention.2} parent=0 // pred_fallthru
    _

// kernel: masked_self_attention.3
$region0: #{masked_self_attention.3}
  #allocation0 [shape = 'u32[]', space=smem, size = 0x4, offset = 0x4, fixed_abs, tag = 'smem constant byte address 0x4 - core index']
  #allocation1 [shape = 'u32[144,128]{1,0:T(1,128)}', space=vmem, size = 0x12000, scoped, tag = 'internal scratch']
  #allocation2 [shape = 'f32[16,1]{1,0:T(8,128)}', space=vmem, size = 0x2000, scoped, tag = 'scratch operand']
  #allocation3 [shape = 'f32[16,1]{1,0:T(8,128)}', space=vmem, size = 0x2000, scoped, tag = 'scratch operand']
  %s0 = inlined_call_operand.vmem [shape: bf16[16,128], index: 0, kind: input, shape index: {}]
  %s1 = inlined_call_operand.vmem [shape: bf16[16,128], index: 1, kind: input, shape index: {}]
  %s2 = inlined_call_operand.vmem [shape: bf16[16,128], index: 2, kind: input, shape index: {}]
  %s3 = inlined_call_operand.vmem [shape: f32[16,128], index: 3, kind: output, shape index: {}]
  %s4 = sld [smem:[#allocation0]]
  $region34: #{masked_self_attention.3} parent=0
    _
  %s6 = ssub.s32 1, %s4
  %s7 = scalar_select 0, %s6, %s4
  // Predicated region
  $region2: #{masked_self_attention.3} parent=0 // pred_check
    _
  $region3: #{masked_self_attention.3} parent=0 // pred_check_branch
    %9 = sbr.rel (0) target = $region5
  $region4: #{masked_self_attention.3} parent=0 // pred_region
    _
  $region5: #{masked_self_attention.3} parent=0 // pred_fallthru
    _
  // Predicated region
  $region6: #{masked_self_attention.3} parent=0 // pred_check
    _
  $region7: #{masked_self_attention.3} parent=0 // pred_check_branch
    %11 = sbr.rel (0) target = $region9
  $region8: #{masked_self_attention.3} parent=0 // pred_region
    _
  $region9: #{masked_self_attention.3} parent=0 // pred_fallthru
    _
  // Predicated region
  $region10: #{masked_self_attention.3} parent=0 // pred_check
    _
  $region11: #{masked_self_attention.3} parent=0 // pred_check_branch
    %13 = sbr.rel (0) target = $region13
  $region12: #{masked_self_attention.3} parent=0 // pred_region
    _
  $region13: #{masked_self_attention.3} parent=0 // pred_fallthru
    _
  %p15 = scmp.eq.s32.totalorder 0, 0
  // Predicated region
  $region14: #{masked_self_attention.3} parent=0 // pred_check
    %p16 = pneg %p15
  $region15: #{masked_self_attention.3} parent=0 // pred_check_branch
    %18 = sbr.rel (%p16) target = $region17
  $region16: #{masked_self_attention.3} parent=0 // pred_region
    %vm19 = vcmask 7168
    %20 = vst.msk [vmem:[#allocation2] sm:$0xff] %vm19, -inf
    %21 = vst.msk [vmem:[#allocation2 + $0x8] sm:$0xff] %vm19, -inf
    %22 = vst.msk [vmem:[#allocation3] sm:$0xff] %vm19, 0.0
    %23 = vst.msk [vmem:[#allocation3 + $0x8] sm:$0xff] %vm19, 0.0
    %24 = vst [vmem:[%s3] sm:$0xff] 0.0
    %25 = vst [vmem:[%s3 + $0x8] sm:$0xff] 0.0
  $region17: #{masked_self_attention.3} parent=0 // pred_fallthru
    _
  %p26 = scmp.lt.s32.totalorder 0, 0
  // Predicated region
  $region18: #{masked_self_attention.3} parent=0 // pred_check
    %p27 = pneg %p26
  $region19: #{masked_self_attention.3} parent=0 // pred_check_branch
    %29 = sbr.rel (%p27) target = $region21
  $region20: #{masked_self_attention.3} parent=0 // pred_region
    %v30 = vld [vmem:[%s0] sm:$0xf]
    %v31 = vld [vmem:[%s0 + $0x4] sm:$0xf]
    %v32 = vld [vmem:[%s1] sm:$0xf]
    %v33 = vld [vmem:[%s1 + $0x4] sm:$0xf]
    %v36 = vunpack.c.l.b16 %v30
    %v37 = vunpack.c.l.b16 %v31
    %v38 = vpack.c.b16 %v37, %v36
    %v42 = vunpack.c.l.b16 %v32
    %v43 = vunpack.c.l.b16 %v33
    %v44 = vpack.c.b16 %v43, %v42
    %46 = vmatprep.subr.bf16.mxu0 0
    %47 = vmatpush1.bf16.xpose.msra.mxu0 0
    %48 = vmatprep.subr.bf16.mxu0 0
    %49 = vmatpush1.bf16.xpose.msra.mxu0 0
    %50 = vmatprep.subr.bf16.mxu0 0
    %51 = vmatpush1.bf16.xpose.msra.mxu0 0
    %52 = vmatprep.subr.bf16.mxu0 0
    %53 = vmatpush1.bf16.xpose.msra.mxu0 0
    %54 = vmatprep.subr.bf16.mxu0 0
    %55 = vmatpush1.bf16.xpose.msra.mxu0 0
    %56 = vmatprep.subr.bf16.mxu0 0
    %57 = vmatpush1.bf16.xpose.msra.mxu0 0
    %58 = vmatprep.subr.bf16.mxu0 0
    %59 = vmatpush1.bf16.xpose.msra.mxu0 0
    %60 = vmatprep.subr.bf16.mxu0 0
    %61 = vmatpush1.bf16.xpose.msra.mxu0 %v44
    %62 = vmatprep.subr.bf16.mxu0 0
    %63 = vmatpush2.bf16.xpose.msra.mxu0 0
    %64 = vmatprep.subr.bf16.mxu0 0
    %65 = vmatpush2.bf16.xpose.msra.mxu0 0
    %66 = vmatprep.subr.bf16.mxu0 0
    %67 = vmatpush2.bf16.xpose.msra.mxu0 0
    %68 = vmatprep.subr.bf16.mxu0 0
    %69 = vmatpush2.bf16.xpose.msra.mxu0 0
    %70 = vmatprep.subr.bf16.mxu0 0
    %71 = vmatpush2.bf16.xpose.msra.mxu0 0
    %72 = vmatprep.subr.bf16.mxu0 0
    %73 = vmatpush2.bf16.xpose.msra.mxu0 0
    %74 = vmatprep.subr.bf16.mxu0 0
    %75 = vmatpush2.bf16.xpose.msra.mxu0 0
    %76 = vmatprep.subr.bf16.mxu0 0
    %77 = vmatpush2.bf16.xpose.msra.mxu0 0
    %78 = vmatprep.mubr.bf16.mxu0 0
    %79 = vmatmul.mubr.bf16.gmra.mxu0 %v38
    %v80 = vpop.f32.mrf.mxu0
    %v81 = vadd.f32 0.0, %v80
    %v82 = vpop.f32.mrf.mxu0
    %v83 = vpop.f32.mrf.mxu0
    %v84 = vadd.f32 0.0, %v83
    %v85 = vpop.f32.mrf.mxu0
    %86 = vdwg.mxu0
    %v87 = vld [vmem:[#allocation2] sm:$0xff]
    %v88 = vld [vmem:[#allocation2 + $0x8] sm:$0xff]
    %vm89 = vcmask 130048
    %v90 = vsel %vm89, %v81, -inf
    %91 = vmax.xlane.f32.xlu0 %v90
    %v92 = vpop.xlane.xlu0 %91
    %v93 = vsel %vm89, %v84, -inf
    %94 = vmax.xlane.f32.xlu0 %v93
    %v95 = vpop.xlane.xlu0 %94
    %v96 = vmax.f32 %v87, %v92
    %v97 = vmax.f32 %v88, %v95
    %v98 = vsub.f32 %v87, %v96
    %v99 = vsub.f32 %v88, %v97
    %v100 = vmul.f32 %v98, 1.442695
    %v101 = vpow.pop %v100
    %v102 = vmul.f32 %v99, 1.442695
    %v103 = vpow.pop %v102
    %105 = vset.pattern.permute.xlu0 0
    %106 = vperm.xlu0 %105, %v96
    %v107 = vpop.permute.xlu0 %106
    %110 = vset.pattern.permute.xlu0 0
    %111 = vperm.xlu0 %110, %v97
    %v112 = vpop.permute.xlu0 %111
    %v114 = vsub.f32 %v81, %v107
    %v115 = vsub.f32 %v84, %v112
    %v116 = vmul.f32 %v114, 1.442695
    %v117 = vpow.pop %v116
    %v118 = vmul.f32 %v115, 1.442695
    %v119 = vpow.pop %v118
    %v120 = vld [vmem:[#allocation3] sm:$0xff]
    %v121 = vld [vmem:[#allocation3 + $0x8] sm:$0xff]
    %v122 = vmul.f32 %v101, %v120
    %v123 = vmul.f32 %v103, %v121
    %v124 = vsel %vm89, %v117, 0.0
    %125 = vadd.xlane.f32.xlu0 %v124
    %v126 = vpop.xlane.xlu0 %125
    %v127 = vsel %vm89, %v119, 0.0
    %128 = vadd.xlane.f32.xlu0 %v127
    %v129 = vpop.xlane.xlu0 %128
    %v130 = vadd.f32 %v122, %v126
    %v131 = vadd.f32 %v123, %v129
    %vm132 = vcmask 7168
    %133 = vst.msk [vmem:[#allocation3] sm:$0xff] %vm132, %v130
    %134 = vst.msk [vmem:[#allocation3 + $0x8] sm:$0xff] %vm132, %v131
    %v135 = vld [vmem:[%s3] sm:$0xff]
    %v136 = vld [vmem:[%s3 + $0x8] sm:$0xff]
    %138 = vset.pattern.permute.xlu0 0
    %139 = vperm.xlu0 %138, %v101
    %v140 = vpop.permute.xlu0 %139
    %143 = vset.pattern.permute.xlu0 0
    %144 = vperm.xlu0 %143, %v103
    %v145 = vpop.permute.xlu0 %144
    %v147 = vmul.f32 %v140, %v135
    %v148 = vmul.f32 %v145, %v136
    %v149 = vpack.c.bf16 %v119, %v117
    %v150 = vld [vmem:[%s2] sm:$0xf]
    %v151 = vld [vmem:[%s2 + $0x4] sm:$0xf]
    %v154 = vunpack.c.l.b16 %v150
    %v155 = vunpack.c.l.b16 %v151
    %v156 = vpack.c.b16 %v155, %v154
    %v159 = vsel %vm89, %v149, 0
    %161 = vmatprep.subr.bf16.mxu0 0
    %162 = vmatpush1.bf16.msra.mxu0 0
    %163 = vmatprep.subr.bf16.mxu0 0
    %164 = vmatpush1.bf16.msra.mxu0 0
    %165 = vmatprep.subr.bf16.mxu0 0
    %166 = vmatpush1.bf16.msra.mxu0 0
    %167 = vmatprep.subr.bf16.mxu0 0
    %168 = vmatpush1.bf16.msra.mxu0 0
    %169 = vmatprep.subr.bf16.mxu0 0
    %170 = vmatpush1.bf16.msra.mxu0 0
    %171 = vmatprep.subr.bf16.mxu0 0
    %172 = vmatpush1.bf16.msra.mxu0 0
    %173 = vmatprep.subr.bf16.mxu0 0
    %174 = vmatpush1.bf16.msra.mxu0 0
    %175 = vmatprep.subr.bf16.mxu0 0
    %176 = vmatpush1.bf16.msra.mxu0 %v156
    %177 = vmatprep.subr.bf16.mxu0 0
    %178 = vmatpush2.bf16.msra.mxu0 0
    %179 = vmatprep.subr.bf16.mxu0 0
    %180 = vmatpush2.bf16.msra.mxu0 0
    %181 = vmatprep.subr.bf16.mxu0 0
    %182 = vmatpush2.bf16.msra.mxu0 0
    %183 = vmatprep.subr.bf16.mxu0 0
    %184 = vmatpush2.bf16.msra.mxu0 0
    %185 = vmatprep.subr.bf16.mxu0 0
    %186 = vmatpush2.bf16.msra.mxu0 0
    %187 = vmatprep.subr.bf16.mxu0 0
    %188 = vmatpush2.bf16.msra.mxu0 0
    %189 = vmatprep.subr.bf16.mxu0 0
    %190 = vmatpush2.bf16.msra.mxu0 0
    %191 = vmatprep.subr.bf16.mxu0 0
    %192 = vmatpush2.bf16.msra.mxu0 0
    %193 = vmatprep.mubr.bf16.mxu0 0
    %194 = vmatmul.mubr.bf16.gmra.mxu0 %v159
    %v195 = vpop.f32.mrf.mxu0
    %v196 = vadd.f32 0.0, %v195
    %v197 = vpop.f32.mrf.mxu0
    %v198 = vpop.f32.mrf.mxu0
    %v199 = vadd.f32 0.0, %v198
    %v200 = vpop.f32.mrf.mxu0
    %201 = vdwg.mxu0
    %v202 = vadd.f32 %v147, %v196
    %v203 = vadd.f32 %v148, %v199
    %204 = vst [vmem:[%s3] sm:$0xff] %v202
    %205 = vst [vmem:[%s3 + $0x8] sm:$0xff] %v203
    %206 = vst.msk [vmem:[#allocation2] sm:$0xff] %vm132, %v96
    %207 = vst.msk [vmem:[#allocation2 + $0x8] sm:$0xff] %vm132, %v97
  $region21: #{masked_self_attention.3} parent=0 // pred_fallthru
    _
  %p208 = scmp.eq.s32.totalorder 0, 0
  // Predicated region
  $region22: #{masked_self_attention.3} parent=0 // pred_check
    %p209 = pneg %p208
  $region23: #{masked_self_attention.3} parent=0 // pred_check_branch
    %211 = sbr.rel (%p209) target = $region25
  $region24: #{masked_self_attention.3} parent=0 // pred_region
    %v212 = vld [vmem:[%s0] sm:$0xf]
    %v213 = vld [vmem:[%s0 + $0x4] sm:$0xf]
    %v214 = vld [vmem:[%s1] sm:$0xf]
    %v215 = vld [vmem:[%s1 + $0x4] sm:$0xf]
    %v218 = vunpack.c.l.b16 %v212
    %v219 = vunpack.c.l.b16 %v213
    %v220 = vpack.c.b16 %v219, %v218
    %v224 = vunpack.c.l.b16 %v214
    %v225 = vunpack.c.l.b16 %v215
    %v226 = vpack.c.b16 %v225, %v224
    %228 = vmatprep.subr.bf16.mxu0 0
    %229 = vmatpush1.bf16.xpose.msra.mxu0 0
    %230 = vmatprep.subr.bf16.mxu0 0
    %231 = vmatpush1.bf16.xpose.msra.mxu0 0
    %232 = vmatprep.subr.bf16.mxu0 0
    %233 = vmatpush1.bf16.xpose.msra.mxu0 0
    %234 = vmatprep.subr.bf16.mxu0 0
    %235 = vmatpush1.bf16.xpose.msra.mxu0 0
    %236 = vmatprep.subr.bf16.mxu0 0
    %237 = vmatpush1.bf16.xpose.msra.mxu0 0
    %238 = vmatprep.subr.bf16.mxu0 0
    %239 = vmatpush1.bf16.xpose.msra.mxu0 0
    %240 = vmatprep.subr.bf16.mxu0 0
    %241 = vmatpush1.bf16.xpose.msra.mxu0 0
    %242 = vmatprep.subr.bf16.mxu0 0
    %243 = vmatpush1.bf16.xpose.msra.mxu0 %v226
    %244 = vmatprep.subr.bf16.mxu0 0
    %245 = vmatpush2.bf16.xpose.msra.mxu0 0
    %246 = vmatprep.subr.bf16.mxu0 0
    %247 = vmatpush2.bf16.xpose.msra.mxu0 0
    %248 = vmatprep.subr.bf16.mxu0 0
    %249 = vmatpush2.bf16.xpose.msra.mxu0 0
    %250 = vmatprep.subr.bf16.mxu0 0
    %251 = vmatpush2.bf16.xpose.msra.mxu0 0
    %252 = vmatprep.subr.bf16.mxu0 0
    %253 = vmatpush2.bf16.xpose.msra.mxu0 0
    %254 = vmatprep.subr.bf16.mxu0 0
    %255 = vmatpush2.bf16.xpose.msra.mxu0 0
    %256 = vmatprep.subr.bf16.mxu0 0
    %257 = vmatpush2.bf16.xpose.msra.mxu0 0
    %258 = vmatprep.subr.bf16.mxu0 0
    %259 = vmatpush2.bf16.xpose.msra.mxu0 0
    %260 = vmatprep.mubr.bf16.mxu0 0
    %261 = vmatmul.mubr.bf16.gmra.mxu0 %v220
    %v262 = vpop.f32.mrf.mxu0
    %v263 = vadd.f32 0.0, %v262
    %v264 = vpop.f32.mrf.mxu0
    %v265 = vpop.f32.mrf.mxu0
    %v266 = vadd.f32 0.0, %v265
    %v267 = vpop.f32.mrf.mxu0
    %268 = vdwg.mxu0
    %v269 = vlaneseq
    %v270 = vshrl.u32 %v269, 7
    %v271 = vadd.s32 %v270, 8
    %v272 = vlaneseq
    %v273 = vand.u32 %v272, 127
    %vm274 = vcmp.ge.s32.totalorder %v270, %v273
    %vm275 = vcmp.ge.s32.totalorder %v271, %v273
    %v276 = vsel %vm274, %v263, -inf
    %v277 = vsel %vm275, %v266, -inf
    %v278 = vld [vmem:[#allocation2] sm:$0xff]
    %v279 = vld [vmem:[#allocation2 + $0x8] sm:$0xff]
    %vm280 = vcmask 130048
    %v281 = vsel %vm280, %v276, -inf
    %282 = vmax.xlane.f32.xlu0 %v281
    %v283 = vpop.xlane.xlu0 %282
    %v284 = vsel %vm280, %v277, -inf
    %285 = vmax.xlane.f32.xlu0 %v284
    %v286 = vpop.xlane.xlu0 %285
    %v287 = vmax.f32 %v278, %v283
    %v288 = vmax.f32 %v279, %v286
    %v289 = vsub.f32 %v278, %v287
    %v290 = vsub.f32 %v279, %v288
    %v291 = vmul.f32 %v289, 1.442695
    %v292 = vpow.pop %v291
    %v293 = vmul.f32 %v290, 1.442695
    %v294 = vpow.pop %v293
    %296 = vset.pattern.permute.xlu0 0
    %297 = vperm.xlu0 %296, %v287
    %v298 = vpop.permute.xlu0 %297
    %301 = vset.pattern.permute.xlu0 0
    %302 = vperm.xlu0 %301, %v288
    %v303 = vpop.permute.xlu0 %302
    %v305 = vsub.f32 %v276, %v298
    %v306 = vsub.f32 %v277, %v303
    %v307 = vmul.f32 %v305, 1.442695
    %v308 = vpow.pop %v307
    %v309 = vmul.f32 %v306, 1.442695
    %v310 = vpow.pop %v309
    %v311 = vld [vmem:[#allocation3] sm:$0xff]
    %v312 = vld [vmem:[#allocation3 + $0x8] sm:$0xff]
    %v313 = vmul.f32 %v292, %v311
    %v314 = vmul.f32 %v294, %v312
    %v315 = vsel %vm280, %v308, 0.0
    %316 = vadd.xlane.f32.xlu0 %v315
    %v317 = vpop.xlane.xlu0 %316
    %v318 = vsel %vm280, %v310, 0.0
    %319 = vadd.xlane.f32.xlu0 %v318
    %v320 = vpop.xlane.xlu0 %319
    %v321 = vadd.f32 %v313, %v317
    %v322 = vadd.f32 %v314, %v320
    %vm323 = vcmask 7168
    %324 = vst.msk [vmem:[#allocation3] sm:$0xff] %vm323, %v321
    %325 = vst.msk [vmem:[#allocation3 + $0x8] sm:$0xff] %vm323, %v322
    %v326 = vld [vmem:[%s3] sm:$0xff]
    %v327 = vld [vmem:[%s3 + $0x8] sm:$0xff]
    %329 = vset.pattern.permute.xlu0 0
    %330 = vperm.xlu0 %329, %v292
    %v331 = vpop.permute.xlu0 %330
    %334 = vset.pattern.permute.xlu0 0
    %335 = vperm.xlu0 %334, %v294
    %v336 = vpop.permute.xlu0 %335
    %v338 = vmul.f32 %v331, %v326
    %v339 = vmul.f32 %v336, %v327
    %v340 = vpack.c.bf16 %v310, %v308
    %v341 = vld [vmem:[%s2] sm:$0xf]
    %v342 = vld [vmem:[%s2 + $0x4] sm:$0xf]
    %v345 = vunpack.c.l.b16 %v341
    %v346 = vunpack.c.l.b16 %v342
    %v347 = vpack.c.b16 %v346, %v345
    %v350 = vsel %vm280, %v340, 0
    %352 = vmatprep.subr.bf16.mxu0 0
    %353 = vmatpush1.bf16.msra.mxu0 0
    %354 = vmatprep.subr.bf16.mxu0 0
    %355 = vmatpush1.bf16.msra.mxu0 0
    %356 = vmatprep.subr.bf16.mxu0 0
    %357 = vmatpush1.bf16.msra.mxu0 0
    %358 = vmatprep.subr.bf16.mxu0 0
    %359 = vmatpush1.bf16.msra.mxu0 0
    %360 = vmatprep.subr.bf16.mxu0 0
    %361 = vmatpush1.bf16.msra.mxu0 0
    %362 = vmatprep.subr.bf16.mxu0 0
    %363 = vmatpush1.bf16.msra.mxu0 0
    %364 = vmatprep.subr.bf16.mxu0 0
    %365 = vmatpush1.bf16.msra.mxu0 0
    %366 = vmatprep.subr.bf16.mxu0 0
    %367 = vmatpush1.bf16.msra.mxu0 %v347
    %368 = vmatprep.subr.bf16.mxu0 0
    %369 = vmatpush2.bf16.msra.mxu0 0
    %370 = vmatprep.subr.bf16.mxu0 0
    %371 = vmatpush2.bf16.msra.mxu0 0
    %372 = vmatprep.subr.bf16.mxu0 0
    %373 = vmatpush2.bf16.msra.mxu0 0
    %374 = vmatprep.subr.bf16.mxu0 0
    %375 = vmatpush2.bf16.msra.mxu0 0
    %376 = vmatprep.subr.bf16.mxu0 0
    %377 = vmatpush2.bf16.msra.mxu0 0
    %378 = vmatprep.subr.bf16.mxu0 0
    %379 = vmatpush2.bf16.msra.mxu0 0
    %380 = vmatprep.subr.bf16.mxu0 0
    %381 = vmatpush2.bf16.msra.mxu0 0
    %382 = vmatprep.subr.bf16.mxu0 0
    %383 = vmatpush2.bf16.msra.mxu0 0
    %384 = vmatprep.mubr.bf16.mxu0 0
    %385 = vmatmul.mubr.bf16.gmra.mxu0 %v350
    %v386 = vpop.f32.mrf.mxu0
    %v387 = vadd.f32 0.0, %v386
    %v388 = vpop.f32.mrf.mxu0
    %v389 = vpop.f32.mrf.mxu0
    %v390 = vadd.f32 0.0, %v389
    %v391 = vpop.f32.mrf.mxu0
    %392 = vdwg.mxu0
    %v393 = vadd.f32 %v338, %v387
    %v394 = vadd.f32 %v339, %v390
    %395 = vst [vmem:[%s3] sm:$0xff] %v393
    %396 = vst [vmem:[%s3 + $0x8] sm:$0xff] %v394
    %397 = vst.msk [vmem:[#allocation2] sm:$0xff] %vm323, %v287
    %398 = vst.msk [vmem:[#allocation2 + $0x8] sm:$0xff] %vm323, %v288
    %v399 = vld [vmem:[%s3] sm:$0xff]
    %v400 = vld [vmem:[%s3 + $0x8] sm:$0xff]
    %v401 = vld [vmem:[#allocation3] sm:$0xff]
    %v402 = vld [vmem:[#allocation3 + $0x8] sm:$0xff]
    %v403 = vrcp.pop %v401
    %v404 = vrcp.pop %v402
    %406 = vset.pattern.permute.xlu0 0
    %407 = vperm.xlu0 %406, %v403
    %v408 = vpop.permute.xlu0 %407
    %411 = vset.pattern.permute.xlu0 0
    %412 = vperm.xlu0 %411, %v404
    %v413 = vpop.permute.xlu0 %412
    %v415 = vmul.f32 %v399, %v408
    %v416 = vmul.f32 %v400, %v413
    %417 = vst [vmem:[%s3] sm:$0xff] %v415
    %418 = vst [vmem:[%s3 + $0x8] sm:$0xff] %v416
  $region25: #{masked_self_attention.3} parent=0 // pred_fallthru
    _
  // Predicated region
  $region26: #{masked_self_attention.3} parent=0 // pred_check
    _
  $region27: #{masked_self_attention.3} parent=0 // pred_check_branch
    %420 = sbr.rel (0) target = $region29
  $region28: #{masked_self_attention.3} parent=0 // pred_region
    _
  $region29: #{masked_self_attention.3} parent=0 // pred_fallthru
    _
  // Predicated region
  $region30: #{masked_self_attention.3} parent=0 // pred_check
    _
  $region31: #{masked_self_attention.3} parent=0 // pred_check_branch
    %422 = sbr.rel (0) target = $region33
  $region32: #{masked_self_attention.3} parent=0 // pred_region
    _
  $region33: #{masked_self_attention.3} parent=0 // pred_fallthru
    _

</llo_original>
